<compile_context>
chip_gen: v6e
topology: v6e:2x2x1
jax: 0.10.0
libtpu: 0.0.40
codegen_flags: <defaults>
</compile_context>

<pallas_src>
import jax
import jax.numpy as jnp
from jax.experimental import pallas as pl
from jax.experimental.pallas import tpu as pltpu


# ---------------------------------------------------------------------------
# Pallas kernel: fused (conv1(k=3)+BN+ReLU) -> (conv2(k=1)+BN+ReLU)
# ---------------------------------------------------------------------------
def _fused_kernel(x_ref, w1_ref, b1_ref, w2_ref, b2_ref, o_ref):
    # x_ref : (1, K1p, TW)  bf16   channel-stacked shifted input tile
    # w1_ref: (Hp, K1p)     bf16   BN-folded, 3-tap-folded conv1 weight (resident)
    # b1_ref: (Hp, 1)       f32    BN-folded conv1 bias (resident)
    # w2_ref: (Hp, Hp)      f32    BN-folded conv2 (k=1) weight (resident)
    # b2_ref: (Hp, 1)       f32    BN-folded conv2 bias (resident)
    # o_ref : (1, Hp, TW)   bf16   embedding tile (shrink == identity)
    x = x_ref[0]                                                      # (K1p, TW)

    # conv1 (k=3) as one MXU matmul over the stacked (tap, channel) axis.
    h = jnp.dot(w1_ref[...], x, preferred_element_type=jnp.float32)   # (Hp, TW) f32
    h = jnp.maximum(h + b1_ref[...], 0.0)                             # bias+ReLU in f32

    # conv2 (k=1): second (tiny) matmul kept fully in f32 -- compute is free
    # in this memory-bound kernel, so keep the extra precision.
    y = jnp.dot(w2_ref[...], h, preferred_element_type=jnp.float32)   # (Hp, TW) f32
    y = jnp.maximum(y + b2_ref[...], 0.0)

    o_ref[0] = y.astype(o_ref.dtype)                                  # bf16 store


def _round_up(x, m):
    return ((x + m - 1) // m) * m


def _choose_length_tile(n_batch, w_out, tw_max):
    """Pick a lane tile: multiple of 128, <= tw_max, >=2 grid steps if possible."""
    n128 = pl.cdiv(w_out, 128)                  # number of 128-lane chunks
    chunks = max(1, min(tw_max // 128, n128))
    if n_batch == 1 and n128 >= 2:
        # v7x has 2 TensorCores: make sure the grid has at least 2 steps.
        chunks = min(chunks, (n128 + 1) // 2)
    tw = 128 * chunks
    wop = _round_up(w_out, tw)                  # multiple of tw by construction
    return tw, wop


# ---------------------------------------------------------------------------
# Wrapper: BN folding, tap folding, minimal padding, tiling, pallas_call
# ---------------------------------------------------------------------------
def headless_net2_forward(x, params, *, tw_max=512,
                          compute_dtype=jnp.bfloat16,
                          out_dtype=jnp.bfloat16):
    """HeadlessNet2.forward(x): returns the penultimate embedding (N, H, W-2)."""
    w1 = params["w1"]            # (H, C_in, K)
    w2 = params["w2"]            # (H, H, 1)
    eps = params["eps"]

    N, C_in, W = x.shape
    H, _, K = w1.shape
    W_out = W - (K - 1)          # 'valid' conv, matches PyTorch Conv1d(padding=0)

    # ---- Fold eval-mode BatchNorm into the conv weights / biases. ----
    scale1 = params["bn1_gamma"] / jnp.sqrt(params["bn1_var"] + eps)
    w1_bn = w1 * scale1[:, None, None]                       # (H, C_in, K)
    b1 = params["bn1_beta"] - params["bn1_mean"] * scale1    # (H,)

    scale2 = params["bn2_gamma"] / jnp.sqrt(params["bn2_var"] + eps)
    w2_bn = w2[:, :, 0] * scale2[:, None]                    # (H, H)
    b2 = params["bn2_beta"] - params["bn2_mean"] * scale2    # (H,)

    # ---- Fold the K temporal taps into a single (H, K*C_in) matmul weight. ----
    w1_flat = jnp.concatenate([w1_bn[:, :, t] for t in range(K)], axis=1)

    # ---- Dim-aware padding (sublane pack only, NOT 128). ----
    # bf16 packs 16 rows per sublane group; f32 needs 8.  Weight/bias blocks are
    # full-array extent, so any size is legal for BlockSpec; the MXU pads the
    # short contraction dim internally.
    sub = 16 if jnp.dtype(compute_dtype).itemsize == 2 else 8
    K1 = K * C_in
    K1p = _round_up(K1, sub)          # e.g. 18 -> 32
    Hp = _round_up(H, sub)            # e.g. 32 -> 32
    tw, Wop = _choose_length_tile(N, W_out, tw_max)

    w1_p = jnp.zeros((Hp, K1p), compute_dtype).at[:H, :K1].set(
        w1_flat.astype(compute_dtype))
    w2_p = jnp.zeros((Hp, Hp), jnp.float32).at[:H, :H].set(
        w2_bn.astype(jnp.float32))
    b1_p = jnp.zeros((Hp, 1), jnp.float32).at[:H, 0].set(b1)
    b2_p = jnp.zeros((Hp, 1), jnp.float32).at[:H, 0].set(b2)

    # ---- Channel-stacked shifted views of x (the K temporal taps). ----
    # With sublane-level (not 128) padding this wrapper copy is small relative
    # to the kernel's own streams.
    # TODO(synk): for very large C_in, build the tap stack in-kernel from a
    # halo tile instead of materializing K shifted copies in HBM.
    x_stack = jnp.concatenate([x[:, :, t:t + W_out] for t in range(K)], axis=1)
    x_p = jnp.zeros((N, K1p, Wop), compute_dtype).at[:, :K1, :W_out].set(
        x_stack.astype(compute_dtype))

    grid = (N, Wop // tw)

    out_bytes = N * Hp * Wop * jnp.dtype(out_dtype).itemsize
    out_p = pl.pallas_call(
        _fused_kernel,
        out_shape=jax.ShapeDtypeStruct((N, Hp, Wop), out_dtype),
        grid_spec=pltpu.PrefetchScalarGridSpec(
            num_scalar_prefetch=0,
            grid=grid,
            in_specs=[
                # activations: streamed, lane-dense tiles (tw is a multiple of 128)
                pl.BlockSpec((1, K1p, tw), lambda n, j: (n, 0, j)),
                # weights / biases: constant index maps -> resident in VMEM
                pl.BlockSpec((Hp, K1p), lambda n, j: (0, 0)),
                pl.BlockSpec((Hp, 1), lambda n, j: (0, 0)),
                pl.BlockSpec((Hp, Hp), lambda n, j: (0, 0)),
                pl.BlockSpec((Hp, 1), lambda n, j: (0, 0)),
            ],
            out_specs=pl.BlockSpec((1, Hp, tw), lambda n, j: (n, 0, j)),
        ),
        compiler_params=pltpu.CompilerParams(
            dimension_semantics=("parallel", "parallel"),
        ),
        cost_estimate=pl.CostEstimate(
            flops=2 * N * Wop * (K1p * Hp + Hp * Hp),
            transcendentals=0,
            bytes_accessed=(x_p.size * x_p.dtype.itemsize
                            + w1_p.size * w1_p.dtype.itemsize
                            + w2_p.size * w2_p.dtype.itemsize
                            + b1_p.size * 4 + b2_p.size * 4
                            + out_bytes),
        ),
    )(x_p, w1_p, b1_p, w2_p, b2_p)

    # Strip the (small) channel/length padding: this is the embedding
    # HeadlessNet2 returns.  Padded rows/columns hold ReLU(bias) garbage and
    # must never be consumed directly.
    return out_p[:, :H, :W_out]


# ---------------------------------------------------------------------------
# Pure-JAX f32 reference of the un-folded module (for validation)
# ---------------------------------------------------------------------------
def reference_forward(x, params):
    eps = params["eps"]
    z = jax.lax.conv_general_dilated(
        x, params["w1"], window_strides=(1,), padding="VALID",
        dimension_numbers=("NCH", "OIH", "NCH"))
    z = ((z - params["bn1_mean"][None, :, None])
         * (params["bn1_gamma"] / jnp.sqrt(params["bn1_var"] + eps))[None, :, None]
         + params["bn1_beta"][None, :, None])
    z = jnp.maximum(z, 0.0)

    y = jnp.einsum("oc,ncw->now", params["w2"][:, :, 0], z)
    y = ((y - params["bn2_mean"][None, :, None])
         * (params["bn2_gamma"] / jnp.sqrt(params["bn2_var"] + eps))[None, :, None]
         + params["bn2_beta"][None, :, None])
    y = jnp.maximum(y, 0.0)
    return y  # shrink == Identity (HeadlessModule) -> penultimate embedding


# ---------------------------------------------------------------------------
if __name__ == "__main__":
    key = jax.random.PRNGKey(0)
    ks = jax.random.split(key, 12)

    N, C_in, W, H, K = 2, 6, 40, 32, 3

    x = jax.random.normal(ks[0], (N, C_in, W), jnp.float32)
    params = {
        "w1": jax.random.normal(ks[1], (H, C_in, K), jnp.float32) / float((C_in * K) ** 0.5),
        "bn1_gamma": 1.0 + 0.1 * jax.random.normal(ks[2], (H,), jnp.float32),
        "bn1_beta": 0.1 * jax.random.normal(ks[3], (H,), jnp.float32),
        "bn1_mean": 0.1 * jax.random.normal(ks[4], (H,), jnp.float32),
        "bn1_var": jax.random.uniform(ks[5], (H,), jnp.float32, 0.5, 1.5),
        "w2": jax.random.normal(ks[6], (H, H, 1), jnp.float32) / float(H ** 0.5),
        "bn2_gamma": 1.0 + 0.1 * jax.random.normal(ks[7], (H,), jnp.float32),
        "bn2_beta": 0.1 * jax.random.normal(ks[8], (H,), jnp.float32),
        "bn2_mean": 0.1 * jax.random.normal(ks[9], (H,), jnp.float32),
        "bn2_var": jax.random.uniform(ks[10], (H,), jnp.float32, 0.5, 1.5),
        "eps": 1e-5,
    }

    out = jax.block_until_ready(headless_net2_forward(x, params))
    ref = jax.block_until_ready(reference_forward(x, params))

    assert out.shape == (N, H, W - K + 1), out.shape

    out_f32 = out.astype(jnp.float32)
    max_err = float(jnp.max(jnp.abs(out_f32 - ref)))
    # bf16 operands / bf16 output, f32 accumulation: abs + relative tolerance.
    tol = 3e-2 + 2e-2 * float(jnp.max(jnp.abs(ref)))
    if max_err > tol:
        raise AssertionError(
            f"Pallas output mismatch vs reference: max|err|={max_err:.4g} > tol={tol:.4g}")

    print("KERNEL_OK")
</pallas_src>

<mosaic_0001>
module attributes {stable_mosaic.version = 11 : i64} {
  func.func @_fused_kernel(%arg0: i32, %arg1: i32, %arg2: memref<1x32x128xbf16, #tpu.memory_space<vmem>>, %arg3: memref<32x32xbf16, #tpu.memory_space<vmem>>, %arg4: memref<32x1xf32, #tpu.memory_space<vmem>>, %arg5: memref<32x32xf32, #tpu.memory_space<vmem>>, %arg6: memref<32x1xf32, #tpu.memory_space<vmem>>, %arg7: memref<1x32x128xbf16, #tpu.memory_space<vmem>>) attributes {dimension_semantics = [#tpu.dimension_semantics<parallel>, #tpu.dimension_semantics<parallel>], iteration_bounds = array<i64: 2, 1>, scalar_prefetch = 0 : i64, scratch_operands = 0 : i64, tpu.core_type = #tpu.core_type<tc>, window_params = [{transform_indices = @transform_0, window_bounds = array<i64: 1, 32, 128>}, {pipeline_mode = #tpu.pipeline_mode<synchronous>, transform_indices = @transform_1, window_bounds = array<i64: 32, 32>}, {pipeline_mode = #tpu.pipeline_mode<synchronous>, transform_indices = @transform_2, window_bounds = array<i64: 32, 1>}, {pipeline_mode = #tpu.pipeline_mode<synchronous>, transform_indices = @transform_3, window_bounds = array<i64: 32, 32>}, {pipeline_mode = #tpu.pipeline_mode<synchronous>, transform_indices = @transform_4, window_bounds = array<i64: 32, 1>}, {transform_indices = @transform_5, window_bounds = array<i64: 1, 32, 128>}]} {
    %c0 = arith.constant 0 : index
    %c0_0 = arith.constant 0 : index
    %c0_1 = arith.constant 0 : index
    %0 = vector.load %arg2[%c0, %c0_0, %c0_1] : memref<1x32x128xbf16, #tpu.memory_space<vmem>>, vector<1x32x128xbf16>
    %1 = vector.shape_cast %0 : vector<1x32x128xbf16> to vector<32x128xbf16>
    %c0_2 = arith.constant 0 : index
    %c0_3 = arith.constant 0 : index
    %2 = vector.load %arg3[%c0_2, %c0_3] : memref<32x32xbf16, #tpu.memory_space<vmem>>, vector<32x32xbf16>
    %cst = arith.constant dense<0.000000e+00> : vector<32x128xf32>
    %3 = tpu.matmul %2, %1, %cst {dimension_numbers = #tpu.dot_dimension_numbers<[1], [0], [0], [1], [0, 0, 1, 1], [], []>} : vector<32x32xbf16>, vector<32x128xbf16>, vector<32x128xf32> -> vector<32x128xf32>
    %c0_4 = arith.constant 0 : index
    %c0_5 = arith.constant 0 : index
    %4 = vector.load %arg4[%c0_4, %c0_5] : memref<32x1xf32, #tpu.memory_space<vmem>>, vector<32x1xf32>
    %5 = vector.broadcast %4 : vector<32x1xf32> to vector<32x128xf32>
    %6 = arith.addf %3, %5 : vector<32x128xf32>
    %cst_6 = arith.constant 0.000000e+00 : f32
    %7 = vector.broadcast %cst_6 : f32 to vector<32x128xf32>
    %8 = arith.maximumf %6, %7 : vector<32x128xf32>
    %c0_7 = arith.constant 0 : index
    %c0_8 = arith.constant 0 : index
    %9 = vector.load %arg5[%c0_7, %c0_8] : memref<32x32xf32, #tpu.memory_space<vmem>>, vector<32x32xf32>
    %cst_9 = arith.constant dense<0.000000e+00> : vector<32x128xf32>
    %10 = tpu.matmul %9, %8, %cst_9 {dimension_numbers = #tpu.dot_dimension_numbers<[1], [0], [0], [1], [0, 0, 1, 1], [], []>} : vector<32x32xf32>, vector<32x128xf32>, vector<32x128xf32> -> vector<32x128xf32>
    %c0_10 = arith.constant 0 : index
    %c0_11 = arith.constant 0 : index
    %11 = vector.load %arg6[%c0_10, %c0_11] : memref<32x1xf32, #tpu.memory_space<vmem>>, vector<32x1xf32>
    %12 = vector.broadcast %11 : vector<32x1xf32> to vector<32x128xf32>
    %13 = arith.addf %10, %12 : vector<32x128xf32>
    %cst_12 = arith.constant 0.000000e+00 : f32
    %14 = vector.broadcast %cst_12 : f32 to vector<32x128xf32>
    %15 = arith.maximumf %13, %14 : vector<32x128xf32>
    %16 = arith.truncf %15 : vector<32x128xf32> to vector<32x128xbf16>
    %c0_13 = arith.constant 0 : index
    %c0_14 = arith.constant 0 : index
    %c0_15 = arith.constant 0 : index
    %17 = vector.load %arg7[%c0_13, %c0_14, %c0_15] : memref<1x32x128xbf16, #tpu.memory_space<vmem>>, vector<1x32x128xbf16>
    %18 = vector.shape_cast %17 : vector<1x32x128xbf16> to vector<32x128xbf16>
    %19 = vector.shape_cast %16 : vector<32x128xbf16> to vector<1x32x128xbf16>
    tpu.vector_store %arg7[%c0_13, %c0_14, %c0_15], %19 {strides = array<i32>} : memref<1x32x128xbf16, #tpu.memory_space<vmem>>, vector<1x32x128xbf16>,
    return
  }
  func.func @transform_0(%arg0: i32, %arg1: i32) -> (i32, i32, i32) {
    %c0_i32 = arith.constant 0 : i32
    %c0_i32_0 = arith.constant 0 : i32
    return %arg0, %c0_i32, %arg1 : i32, i32, i32
  }
  func.func @transform_1(%arg0: i32, %arg1: i32) -> (i32, i32) {
    %c0_i32 = arith.constant 0 : i32
    %c0_i32_0 = arith.constant 0 : i32
    %c0_i32_1 = arith.constant 0 : i32
    return %c0_i32, %c0_i32_0 : i32, i32
  }
  func.func @transform_2(%arg0: i32, %arg1: i32) -> (i32, i32) {
    %c0_i32 = arith.constant 0 : i32
    %c0_i32_0 = arith.constant 0 : i32
    %c0_i32_1 = arith.constant 0 : i32
    return %c0_i32, %c0_i32_0 : i32, i32
  }
  func.func @transform_3(%arg0: i32, %arg1: i32) -> (i32, i32) {
    %c0_i32 = arith.constant 0 : i32
    %c0_i32_0 = arith.constant 0 : i32
    %c0_i32_1 = arith.constant 0 : i32
    return %c0_i32, %c0_i32_0 : i32, i32
  }
  func.func @transform_4(%arg0: i32, %arg1: i32) -> (i32, i32) {
    %c0_i32 = arith.constant 0 : i32
    %c0_i32_0 = arith.constant 0 : i32
    %c0_i32_1 = arith.constant 0 : i32
    return %c0_i32, %c0_i32_0 : i32, i32
  }
  func.func @transform_5(%arg0: i32, %arg1: i32) -> (i32, i32, i32) {
    %c0_i32 = arith.constant 0 : i32
    %c0_i32_0 = arith.constant 0 : i32
    return %arg0, %c0_i32, %arg1 : i32, i32, i32
  }
}

</mosaic_0001>

<llo_original>
// kernel: tpu_custom_call.1
$region0: #{tpu_custom_call.1}
  #allocation0 [shape = 'u32[]', space=smem, size = 0x4, offset = 0x4, fixed_abs, tag = 'smem constant byte address 0x4 - core index']
  #allocation1 [shape = 'u32[144,128]{1,0:T(1,128)}', space=vmem, size = 0x12000, scoped, tag = 'internal scratch']
  %s0 = inlined_call_operand.vmem [shape: bf16[2,32,128], index: 0, kind: input, shape index: {}]
  %s1 = inlined_call_operand.hbm [shape: bf16[32,32], index: 1, kind: input, shape index: {}]
  %s2 = inlined_call_operand.vmem [shape: f32[32,1], index: 2, kind: input, shape index: {}]
  %s3 = inlined_call_operand.vmem [shape: f32[32,32], index: 3, kind: input, shape index: {}]
  %s4 = inlined_call_operand.vmem [shape: f32[32,1], index: 4, kind: input, shape index: {}]
  %s5 = inlined_call_operand.hbm [shape: bf16[2,32,128], index: 5, kind: output, shape index: {}]
  %s6 = sld [smem:[#allocation0]]
  $region57: #{tpu_custom_call.1} parent=0
    _
  %s8 = ssub.s32 1, %s6
  %s9 = scalar_select 0, %s8, %s6
  $region1: #{tpu_custom_call.1} parent=0
    #allocation2 [shape = 'u8[8192]{0}', space=vmem, size = 0x2000, scoped, tag = 'input window, operand 1, single buffered']
    #allocation3 [shape = 's32[2]{0}', space=sflag, size = 0x8, scoped, tag = 'scoped memory for tpu_custom_call.1']
    #allocation4 [shape = 's32[2]{0}', space=sflag, size = 0x8, scoped, tag = 'scoped memory for tpu_custom_call.1']
    #allocation5 [shape = 'u8[16384]{0}', space=vmem, size = 0x4000, scoped, tag = 'output window, operand 0']
    %10 = vsyncpa [#allocation3], 0
    %11 = vsyncpa [#allocation4], 0
    %s12 = scalar_lea.sflag [#allocation4], 1
    %13 = vsyncpa %s12, 0
    loop: start=0, step=1, limit=4
    $region2: #{tpu_custom_call.1} parent=1 // loop_pre_header
      _
    $region3: #{tpu_custom_call.1} parent=1 // loop_header
      %s15 = sphi 0, %s19
      %p16 = scmp.ge.s32.totalorder %s15, 4
      %s22 = sphi 0, %s34
      %s23 = sphi 0, %s30
      %s24 = sphi 0, %s22
      %s25 = sphi 0, %s23
      %s26 = sphi 0, %s24
      %s27 = sphi 0, %s25
      %s39 = sphi 0, %s41
      %s42 = sphi 0, %s39
      %s43 = sphi 0, %s42
      %s59 = sphi 0, %s43
      %s63 = sphi 0, %s63
      %s65 = sphi 0, %s63
      %s66 = sphi 0, %s65
      %s80 = sphi 0, %s66
      %s84 = sphi 0, %s84
      %s86 = sphi 0, %s84
      %s87 = sphi 0, %s86
      %s101 = sphi 0, %s87
      %s105 = sphi 0, %s105
      %s107 = sphi 0, %s105
      %s108 = sphi 0, %s107
      %s122 = sphi 0, %s108
      %s126 = sphi 0, %s126
      %s128 = sphi 0, %s126
      %s129 = sphi 0, %s128
      %s143 = sphi 0, %s129
      %s151 = sphi 0, %s153
      %s154 = sphi 0, %s151
      %s155 = sphi 0, %s154
      %s171 = sphi 0, %s155
    $region4: #{tpu_custom_call.1} parent=1 // loop_header_branch
      %18 = sbr.rel (%p16) target = $region8
    $region5: #{tpu_custom_call.1} parent=1 // loop_body
      %s20 = ssub.s32 %s15, 1
      %s21 = ssub.s32 %s15, 2
      %s28 = sadd.s32 1, %s23
      %p29 = scmp.ge.s32.totalorder %s28, 1
      %s30 = scalar_select %p29, 0, %s28
      %s31 = sadd.s32 1, %s22
      %s32 = scalar_select %p29, %s31, %s22
      %p33 = scmp.ge.s32.totalorder %s32, 2
      %s34 = scalar_select %p33, 0, %s32
      %s35 = ssub.s32 %s22, %s34
      %s36 = ssub.s32 %s23, %s30
      %s37 = sor.u32 %s35, %s36
      %p38 = scmp.eq.s32.totalorder %s37, 0
      %s40 = sadd.s32 %s39, 1
      %s41 = scalar_select %p38, %s39, %s40
      %p44 = pneg %p38
      %p45 = scmp.eq.s32.totalorder %s15, 1
      %p46 = por %p44, %p45
      %p47 = scmp.ne.s32.totalorder %s39, %s42
      %p48 = scmp.eq.s32.totalorder %s15, 0
      %p49 = por %p47, %p48
      %p50 = scmp.ne.s32.totalorder %s39, %s42
      %p51 = scmp.eq.s32.totalorder %s20, 1
      %p52 = por %p50, %p51
      %p53 = scmp.ne.s32.totalorder %s42, %s43
      %p54 = scmp.eq.s32.totalorder %s20, 0
      %p55 = por %p53, %p54
      %p56 = scmp.ne.s32.totalorder %s42, %s43
      %p57 = scmp.eq.s32.totalorder %s21, 1
      %p58 = por %p56, %p57
      %p60 = scmp.ne.s32.totalorder %s43, %s59
      %p61 = scmp.eq.s32.totalorder %s21, 0
      %p62 = por %p60, %p61
      %s64 = sadd.s32 %s63, 1
      %p67 = scmp.eq.s32.totalorder %s15, 1
      %p68 = scmp.ne.s32.totalorder %s63, %s65
      %p69 = scmp.eq.s32.totalorder %s15, 0
      %p70 = por %p68, %p69
      %p71 = scmp.ne.s32.totalorder %s63, %s65
      %p72 = scmp.eq.s32.totalorder %s20, 1
      %p73 = por %p71, %p72
      %p74 = scmp.ne.s32.totalorder %s65, %s66
      %p75 = scmp.eq.s32.totalorder %s20, 0
      %p76 = por %p74, %p75
      %p77 = scmp.ne.s32.totalorder %s65, %s66
      %p78 = scmp.eq.s32.totalorder %s21, 1
      %p79 = por %p77, %p78
      %p81 = scmp.ne.s32.totalorder %s66, %s80
      %p82 = scmp.eq.s32.totalorder %s21, 0
      %p83 = por %p81, %p82
      %s85 = sadd.s32 %s84, 1
      %p88 = scmp.eq.s32.totalorder %s15, 1
      %p89 = scmp.ne.s32.totalorder %s84, %s86
      %p90 = scmp.eq.s32.totalorder %s15, 0
      %p91 = por %p89, %p90
      %p92 = scmp.ne.s32.totalorder %s84, %s86
      %p93 = scmp.eq.s32.totalorder %s20, 1
      %p94 = por %p92, %p93
      %p95 = scmp.ne.s32.totalorder %s86, %s87
      %p96 = scmp.eq.s32.totalorder %s20, 0
      %p97 = por %p95, %p96
      %p98 = scmp.ne.s32.totalorder %s86, %s87
      %p99 = scmp.eq.s32.totalorder %s21, 1
      %p100 = por %p98, %p99
      %p102 = scmp.ne.s32.totalorder %s87, %s101
      %p103 = scmp.eq.s32.totalorder %s21, 0
      %p104 = por %p102, %p103
      %s106 = sadd.s32 %s105, 1
      %p109 = scmp.eq.s32.totalorder %s15, 1
      %p110 = scmp.ne.s32.totalorder %s105, %s107
      %p111 = scmp.eq.s32.totalorder %s15, 0
      %p112 = por %p110, %p111
      %p113 = scmp.ne.s32.totalorder %s105, %s107
      %p114 = scmp.eq.s32.totalorder %s20, 1
      %p115 = por %p113, %p114
      %p116 = scmp.ne.s32.totalorder %s107, %s108
      %p117 = scmp.eq.s32.totalorder %s20, 0
      %p118 = por %p116, %p117
      %p119 = scmp.ne.s32.totalorder %s107, %s108
      %p120 = scmp.eq.s32.totalorder %s21, 1
      %p121 = por %p119, %p120
      %p123 = scmp.ne.s32.totalorder %s108, %s122
      %p124 = scmp.eq.s32.totalorder %s21, 0
      %p125 = por %p123, %p124
      %s127 = sadd.s32 %s126, 1
      %p130 = scmp.eq.s32.totalorder %s15, 1
      %p131 = scmp.ne.s32.totalorder %s126, %s128
      %p132 = scmp.eq.s32.totalorder %s15, 0
      %p133 = por %p131, %p132
      %p134 = scmp.ne.s32.totalorder %s126, %s128
      %p135 = scmp.eq.s32.totalorder %s20, 1
      %p136 = por %p134, %p135
      %p137 = scmp.ne.s32.totalorder %s128, %s129
      %p138 = scmp.eq.s32.totalorder %s20, 0
      %p139 = por %p137, %p138
      %p140 = scmp.ne.s32.totalorder %s128, %s129
      %p141 = scmp.eq.s32.totalorder %s21, 1
      %p142 = por %p140, %p141
      %p144 = scmp.ne.s32.totalorder %s129, %s143
      %p145 = scmp.eq.s32.totalorder %s21, 0
      %p146 = por %p144, %p145
      %s147 = ssub.s32 %s22, %s34
      %s148 = ssub.s32 %s23, %s30
      %s149 = sor.u32 %s147, %s148
      %p150 = scmp.eq.s32.totalorder %s149, 0
      %s152 = sadd.s32 %s151, 1
      %s153 = scalar_select %p150, %s151, %s152
      %p156 = pneg %p150
      %p157 = scmp.eq.s32.totalorder %s15, 1
      %p158 = por %p156, %p157
      %p159 = scmp.ne.s32.totalorder %s151, %s154
      %p160 = scmp.eq.s32.totalorder %s15, 0
      %p161 = por %p159, %p160
      %p162 = scmp.ne.s32.totalorder %s151, %s154
      %p163 = scmp.eq.s32.totalorder %s20, 1
      %p164 = por %p162, %p163
      %p165 = scmp.ne.s32.totalorder %s154, %s155
      %p166 = scmp.eq.s32.totalorder %s20, 0
      %p167 = por %p165, %p166
      %p168 = scmp.ne.s32.totalorder %s154, %s155
      %p169 = scmp.eq.s32.totalorder %s21, 1
      %p170 = por %p168, %p169
      %p172 = scmp.ne.s32.totalorder %s155, %s171
      %p173 = scmp.eq.s32.totalorder %s21, 0
      %p174 = por %p172, %p173
      %p175 = scmp.le.s32.totalorder 1, %s15
      %p176 = scmp.lt.s32.totalorder %s15, 3
      %p177 = pnand %p175, %p176
      %p178 = pneg %p177
      // Predicated region
      $region9: #{tpu_custom_call.1} parent=5 // pred_check
        _
      $region10: #{tpu_custom_call.1} parent=5 // pred_check_branch
        %180 = sbr.rel (%p177) target = $region12
      $region11: #{tpu_custom_call.1} parent=5 // pred_region
        %s181 = ssub.s32 %s15, 1
        // Predicated region
        $region13: #{tpu_custom_call.1} parent=11 // pred_check
          %p182 = pneg %p76
        $region14: #{tpu_custom_call.1} parent=11 // pred_check_branch
          %184 = sbr.rel (%p182) target = $region16
        $region15: #{tpu_custom_call.1} parent=11 // pred_region
          %s186 = ssub.s32 256, 256
          %187 = vsyncadd [#allocation3], %s186
          %s188 = sshll.u32 [#allocation2], 4
          %s189 = int_to_ptr.vmem [resolvable:$true] %s188
          %194 = dma.hbm_to_vmem [thread:$0]  %s1, 256, %s189, [#allocation3], 64, 64, 4
        $region16: #{tpu_custom_call.1} parent=11 // pred_fallthru
          _
        // Predicated region
        $region17: #{tpu_custom_call.1} parent=11 // pred_check
          %p195 = pneg %p97
        $region18: #{tpu_custom_call.1} parent=11 // pred_check_branch
          %197 = sbr.rel (%p195) target = $region20
        $region19: #{tpu_custom_call.1} parent=11 // pred_region
          _
        $region20: #{tpu_custom_call.1} parent=11 // pred_fallthru
          _
        // Predicated region
        $region21: #{tpu_custom_call.1} parent=11 // pred_check
          %p198 = pneg %p118
        $region22: #{tpu_custom_call.1} parent=11 // pred_check_branch
          %200 = sbr.rel (%p198) target = $region24
        $region23: #{tpu_custom_call.1} parent=11 // pred_region
          _
        $region24: #{tpu_custom_call.1} parent=11 // pred_fallthru
          _
        // Predicated region
        $region25: #{tpu_custom_call.1} parent=11 // pred_check
          %p201 = pneg %p139
        $region26: #{tpu_custom_call.1} parent=11 // pred_check_branch
          %203 = sbr.rel (%p201) target = $region28
        $region27: #{tpu_custom_call.1} parent=11 // pred_region
          _
        $region28: #{tpu_custom_call.1} parent=11 // pred_fallthru
          _
      $region12: #{tpu_custom_call.1} parent=5 // pred_fallthru
        _
      %p204 = scmp.lt.s32.totalorder %s15, 2
      // Predicated region
      $region29: #{tpu_custom_call.1} parent=5 // pred_check
        %p205 = pneg %p204
      $region30: #{tpu_custom_call.1} parent=5 // pred_check_branch
        %207 = sbr.rel (%p205) target = $region32
      $region31: #{tpu_custom_call.1} parent=5 // pred_region
        // Predicated region
        $region33: #{tpu_custom_call.1} parent=31 // pred_check
          %p208 = pneg %p49
        $region34: #{tpu_custom_call.1} parent=31 // pred_check_branch
          %210 = sbr.rel (%p208) target = $region36
        $region35: #{tpu_custom_call.1} parent=31 // pred_region
          %p211 = scmp.lt.s32.totalorder %s22, 1
          %s212 = scalar_select %p211, %s22, 1
          %p213 = scmp.lt.s32.totalorder %s23, 0
          %s214 = scalar_select %p213, %s23, 0
          %s215 = smul.addr %s212, 4
          %s216 = sadd.s32 %s214, %s215
          %s217 = smul.addr %s216, 4
          %s218 = scalar_lea.vmem %s0, %s217
        $region36: #{tpu_custom_call.1} parent=31 // pred_fallthru
          _
      $region32: #{tpu_custom_call.1} parent=5 // pred_fallthru
        _
      %p219 = scmp.le.s32.totalorder 1, %s15
      %p220 = scmp.lt.s32.totalorder %s15, 3
      %p221 = pnand %p219, %p220
      %p222 = pneg %p221
      // Predicated region
      $region37: #{tpu_custom_call.1} parent=5 // pred_check
        _
      $region38: #{tpu_custom_call.1} parent=5 // pred_check_branch
        %224 = sbr.rel (%p221) target = $region40
      $region39: #{tpu_custom_call.1} parent=5 // pred_region
        %s225 = ssub.s32 %s15, 1
        // Predicated region
        $region41: #{tpu_custom_call.1} parent=39 // pred_check
          %p226 = pneg %p76
        $region42: #{tpu_custom_call.1} parent=39 // pred_check_branch
          %228 = sbr.rel (%p226) target = $region44
        $region43: #{tpu_custom_call.1} parent=39 // pred_region
          %229 = dma.done [#allocation3], 256
        $region44: #{tpu_custom_call.1} parent=39 // pred_fallthru
          _
        %p230 = scmp.lt.s32.totalorder %s24, 1
        %s231 = scalar_select %p230, %s24, 1
        %p232 = scmp.lt.s32.totalorder %s25, 0
        %s233 = scalar_select %p232, %s25, 0
        %s234 = smul.addr %s231, 4
        %s235 = sadd.s32 %s233, %s234
        %s236 = smul.addr %s235, 4
        %s237 = scalar_lea.vmem %s0, %s236
        %p238 = pneg %p55
        %p239 = pneg %p52
        %p240 = pneg %p76
        %p241 = pneg %p73
        %p242 = pneg %p97
        %p243 = pneg %p94
        %p244 = pneg %p118
        %p245 = pneg %p115
        %p246 = pneg %p139
        %p247 = pneg %p136
        %p248 = pneg %p167
        %p249 = pneg %p164
        %s250 = sand.u32 %s154, 1
        %s251 = scalar_lea.sflag [#allocation4], %s250
        %s252 = sand.u32 %s154, 1
        %s253 = smul.addr %s252, 16
        %s254 = scalar_lea.vmem [#allocation5], %s253
        %p255 = scmp.lt.s32.totalorder %s24, 1
        %s256 = scalar_select %p255, %s24, 1
        %p257 = scmp.lt.s32.totalorder %s25, 0
        %s258 = scalar_select %p257, %s25, 0
        %s259 = smul.addr %s256, 4
        %s260 = sadd.s32 %s258, %s259
        %s261 = smul.addr %s260, 4
        %s262 = scalar_lea.vmem %s0, %s261
        %v264 = vld [vmem:[%s262] sm:$0xf]
        %v265 = vld [vmem:[%s262 + $0x4] sm:$0xf]
        %v266 = vld [vmem:[%s262 + $0x8] sm:$0xf]
        %v267 = vld [vmem:[%s262 + $0xc] sm:$0xf]
        %v268 = vld [vmem:[#allocation2] sm:$0xf]
        %v269 = vld [vmem:[#allocation2 + $0x4] sm:$0xf]
        %v270 = vld [vmem:[#allocation2 + $0x8] sm:$0xf]
        %v271 = vld [vmem:[#allocation2 + $0xc] sm:$0xf]
        %v272 = vld [vmem:[%s2] sm:$0xff]
        %v273 = vld [vmem:[%s2 + $0x8] sm:$0xff]
        %v274 = vld [vmem:[%s2 + $0x10] sm:$0xff]
        %v275 = vld [vmem:[%s2 + $0x18] sm:$0xff]
        %277 = vset.pattern.permute.xlu0 0
        %278 = vperm.xlu0 %277, %v272
        %v279 = vpop.permute.xlu0 %278
        %282 = vset.pattern.permute.xlu0 0
        %283 = vperm.xlu0 %282, %v273
        %v284 = vpop.permute.xlu0 %283
        %287 = vset.pattern.permute.xlu0 0
        %288 = vperm.xlu0 %287, %v274
        %v289 = vpop.permute.xlu0 %288
        %292 = vset.pattern.permute.xlu0 0
        %293 = vperm.xlu0 %292, %v275
        %v294 = vpop.permute.xlu0 %293
        %v300 = vunpack.c.l.b16 %v268
        %v301 = vunpack.c.l.b16 %v269
        %v302 = vunpack.c.l.b16 %v270
        %v303 = vunpack.c.l.b16 %v271
        %v304 = vpack.c.b16 %v301, %v300
        %v305 = vpack.c.b16 %v303, %v302
        %v310 = vunpack.c.l.b16 %v264
        %v311 = vunpack.c.l.b16 %v265
        %v312 = vunpack.c.l.b16 %v266
        %v313 = vunpack.c.l.b16 %v267
        %v314 = vpack.c.b16 %v311, %v310
        %v315 = vpack.c.b16 %v313, %v312
        %vm318 = vcmask 261120
        %v320 = vsel %vm318, %v304, 0
        %v323 = vsel %vm318, %v305, 0
        %325 = vmatprep.subr.bf16.mxu0 0
        %326 = vmatpush1.bf16.msra.mxu0 0
        %327 = vmatprep.subr.bf16.mxu0 0
        %328 = vmatpush1.bf16.msra.mxu0 0
        %329 = vmatprep.subr.bf16.mxu0 0
        %330 = vmatpush1.bf16.msra.mxu0 0
        %331 = vmatprep.subr.bf16.mxu0 0
        %332 = vmatpush1.bf16.msra.mxu0 0
        %333 = vmatprep.subr.bf16.mxu0 0
        %334 = vmatpush1.bf16.msra.mxu0 0
        %335 = vmatprep.subr.bf16.mxu0 0
        %336 = vmatpush1.bf16.msra.mxu0 0
        %337 = vmatprep.subr.bf16.mxu0 0
        %338 = vmatpush1.bf16.msra.mxu0 %v315
        %339 = vmatprep.subr.bf16.mxu0 0
        %340 = vmatpush1.bf16.msra.mxu0 %v314
        %341 = vmatprep.subr.bf16.mxu0 0
        %342 = vmatpush2.bf16.msra.mxu0 0
        %343 = vmatprep.subr.bf16.mxu0 0
        %344 = vmatpush2.bf16.msra.mxu0 0
        %345 = vmatprep.subr.bf16.mxu0 0
        %346 = vmatpush2.bf16.msra.mxu0 0
        %347 = vmatprep.subr.bf16.mxu0 0
        %348 = vmatpush2.bf16.msra.mxu0 0
        %349 = vmatprep.subr.bf16.mxu0 0
        %350 = vmatpush2.bf16.msra.mxu0 0
        %351 = vmatprep.subr.bf16.mxu0 0
        %352 = vmatpush2.bf16.msra.mxu0 0
        %353 = vmatprep.subr.bf16.mxu0 0
        %354 = vmatpush2.bf16.msra.mxu0 0
        %355 = vmatprep.subr.bf16.mxu0 0
        %356 = vmatpush2.bf16.msra.mxu0 0
        %357 = vmatprep.mubr.bf16.mxu0 0
        %358 = vmatmul.mubr.bf16.gmra.mxu0 %v320
        %v359 = vpop.f32.mrf.mxu0
        %v360 = vadd.f32 %v279, %v359
        %v361 = vpop.f32.mrf.mxu0
        %v362 = vpop.f32.mrf.mxu0
        %v363 = vadd.f32 %v284, %v362
        %v364 = vpop.f32.mrf.mxu0
        %365 = vmatprep.mubr.bf16.mxu0 0
        %366 = vmatmul.mubr.bf16.gmra.mxu0 %v323
        %v367 = vpop.f32.mrf.mxu0
        %v368 = vadd.f32 %v289, %v367
        %v369 = vpop.f32.mrf.mxu0
        %v370 = vpop.f32.mrf.mxu0
        %v371 = vadd.f32 %v294, %v370
        %v372 = vpop.f32.mrf.mxu0
        %373 = vdwg.mxu0
        %v374 = vmax.f32 %v360, 0.0
        %v375 = vmax.f32 %v363, 0.0
        %v376 = vmax.f32 %v368, 0.0
        %v377 = vmax.f32 %v371, 0.0
        %v378 = vld [vmem:[%s3] sm:$0xff]
        %v379 = vld [vmem:[%s3 + $0x8] sm:$0xff]
        %v380 = vld [vmem:[%s3 + $0x10] sm:$0xff]
        %v381 = vld [vmem:[%s3 + $0x18] sm:$0xff]
        %v382 = vld [vmem:[%s4] sm:$0xff]
        %v383 = vld [vmem:[%s4 + $0x8] sm:$0xff]
        %v384 = vld [vmem:[%s4 + $0x10] sm:$0xff]
        %v385 = vld [vmem:[%s4 + $0x18] sm:$0xff]
        %387 = vset.pattern.permute.xlu0 0
        %388 = vperm.xlu0 %387, %v382
        %v389 = vpop.permute.xlu0 %388
        %392 = vset.pattern.permute.xlu0 0
        %393 = vperm.xlu0 %392, %v383
        %v394 = vpop.permute.xlu0 %393
        %397 = vset.pattern.permute.xlu0 0
        %398 = vperm.xlu0 %397, %v384
        %v399 = vpop.permute.xlu0 %398
        %402 = vset.pattern.permute.xlu0 0
        %403 = vperm.xlu0 %402, %v385
        %v404 = vpop.permute.xlu0 %403
        %v407 = vsel %vm318, %v378, 0
        %v410 = vsel %vm318, %v379, 0
        %v413 = vsel %vm318, %v380, 0
        %v416 = vsel %vm318, %v381, 0
        %418 = vmatprep.subr.mxu0 0.0
        %419 = vmatpush1.msra.mxu0 0.0
        %420 = vmatprep.subr.mxu0 0.0
        %421 = vmatpush1.msra.mxu0 0.0
        %422 = vmatprep.subr.mxu0 0.0
        %423 = vmatpush1.msra.mxu0 0.0
        %424 = vmatprep.subr.mxu0 0.0
        %425 = vmatpush1.msra.mxu0 0.0
        %426 = vmatprep.subr.mxu0 0.0
        %427 = vmatpush1.msra.mxu0 0.0
        %428 = vmatprep.subr.mxu0 0.0
        %429 = vmatpush1.msra.mxu0 0.0
        %430 = vmatprep.subr.mxu0 0.0
        %431 = vmatpush1.msra.mxu0 0.0
        %432 = vmatprep.subr.mxu0 0.0
        %433 = vmatpush1.msra.mxu0 0.0
        %434 = vmatprep.subr.mxu0 0.0
        %435 = vmatpush1.msra.mxu0 0.0
        %436 = vmatprep.subr.mxu0 0.0
        %437 = vmatpush1.msra.mxu0 0.0
        %438 = vmatprep.subr.mxu0 0.0
        %439 = vmatpush1.msra.mxu0 0.0
        %440 = vmatprep.subr.mxu0 0.0
        %441 = vmatpush1.msra.mxu0 0.0
        %442 = vmatprep.subr.mxu0 0.0
        %443 = vmatpush1.msra.mxu0 %v377
        %444 = vmatprep.subr.mxu0 0.0
        %445 = vmatpush1.msra.mxu0 %v376
        %446 = vmatprep.subr.mxu0 0.0
        %447 = vmatpush1.msra.mxu0 %v375
        %448 = vmatprep.subr.mxu0 0.0
        %449 = vmatpush1.msra.mxu0 %v374
        %450 = vmatprep.subr.mxu0 0.0
        %451 = vmatpush2.msra.mxu0 0.0
        %452 = vmatprep.subr.mxu0 0.0
        %453 = vmatpush2.msra.mxu0 0.0
        %454 = vmatprep.subr.mxu0 0.0
        %455 = vmatpush2.msra.mxu0 0.0
        %456 = vmatprep.subr.mxu0 0.0
        %457 = vmatpush2.msra.mxu0 0.0
        %458 = vmatprep.subr.mxu0 0.0
        %459 = vmatpush2.msra.mxu0 0.0
        %460 = vmatprep.subr.mxu0 0.0
        %461 = vmatpush2.msra.mxu0 0.0
        %462 = vmatprep.subr.mxu0 0.0
        %463 = vmatpush2.msra.mxu0 0.0
        %464 = vmatprep.subr.mxu0 0.0
        %465 = vmatpush2.msra.mxu0 0.0
        %466 = vmatprep.subr.mxu0 0.0
        %467 = vmatpush2.msra.mxu0 0.0
        %468 = vmatprep.subr.mxu0 0.0
        %469 = vmatpush2.msra.mxu0 0.0
        %470 = vmatprep.subr.mxu0 0.0
        %471 = vmatpush2.msra.mxu0 0.0
        %472 = vmatprep.subr.mxu0 0.0
        %473 = vmatpush2.msra.mxu0 0.0
        %474 = vmatprep.subr.mxu0 0.0
        %475 = vmatpush2.msra.mxu0 0.0
        %476 = vmatprep.subr.mxu0 0.0
        %477 = vmatpush2.msra.mxu0 0.0
        %478 = vmatprep.subr.mxu0 0.0
        %479 = vmatpush2.msra.mxu0 0.0
        %480 = vmatprep.subr.mxu0 0.0
        %481 = vmatpush2.msra.mxu0 0.0
        %482 = vmatprep.mubr.f32.mxu0 0.0
        %483 = vmatmul.mubr.f32.gmra.mxu0 %v407
        %v484 = vpop.f32.mrf.mxu0
        %v485 = vadd.f32 %v389, %v484
        %v486 = vpop.f32.mrf.mxu0
        %487 = vmatprep.mubr.f32.mxu0 0.0
        %488 = vmatmul.mubr.f32.gmra.mxu0 %v410
        %v489 = vpop.f32.mrf.mxu0
        %v490 = vadd.f32 %v394, %v489
        %v491 = vpop.f32.mrf.mxu0
        %492 = vmatprep.mubr.f32.mxu0 0.0
        %493 = vmatmul.mubr.f32.gmra.mxu0 %v413
        %v494 = vpop.f32.mrf.mxu0
        %v495 = vadd.f32 %v399, %v494
        %v496 = vpop.f32.mrf.mxu0
        %497 = vmatprep.mubr.f32.mxu0 0.0
        %498 = vmatmul.mubr.f32.gmra.mxu0 %v416
        %v499 = vpop.f32.mrf.mxu0
        %v500 = vadd.f32 %v404, %v499
        %v501 = vpop.f32.mrf.mxu0
        %502 = vdwg.mxu0
        %v503 = vmax.f32 %v485, 0.0
        %v504 = vmax.f32 %v490, 0.0
        %v505 = vmax.f32 %v495, 0.0
        %v506 = vmax.f32 %v500, 0.0
        %v507 = vpack.c.bf16 %v504, %v503
        %v508 = vpack.c.bf16 %v506, %v505
        %v511 = vunpack.c.l.b16 %v507
        %v512 = vunpack.c.h.b16 %v507
        %v513 = vunpack.c.l.b16 %v508
        %v514 = vunpack.c.h.b16 %v508
        %v515 = vpack.c.b16 %v511, %v511
        %v516 = vpack.c.b16 %v512, %v512
        %v517 = vpack.c.b16 %v513, %v513
        %v518 = vpack.c.b16 %v514, %v514
        %523 = vst [vmem:[%s254] sm:$0xf] %v515
        %524 = vst [vmem:[%s254 + $0x4] sm:$0xf] %v516
        %525 = vst [vmem:[%s254 + $0x8] sm:$0xf] %v517
        %526 = vst [vmem:[%s254 + $0xc] sm:$0xf] %v518
        %s527 = sand.u32 %s154, 1
        %s528 = scalar_lea.sflag [#allocation4], %s527
        %s529 = sand.u32 %s154, 1
        %s530 = smul.addr %s529, 16
        %s531 = scalar_lea.vmem [#allocation5], %s530
        // Predicated region
        $region45: #{tpu_custom_call.1} parent=39 // pred_check
          %p532 = pneg %p164
        $region46: #{tpu_custom_call.1} parent=39 // pred_check_branch
          %534 = sbr.rel (%p532) target = $region48
        $region47: #{tpu_custom_call.1} parent=39 // pred_region
          %s536 = ssub.s32 256, 256
          %537 = vsyncadd %s528, %s536
          %s538 = smul.addr %s24, 4
          %s539 = sadd.s32 %s25, %s538
          %s540 = smul.addr %s539, 64
          %s541 = scalar_lea.hbm %s5, %s540
          %s542 = sshll.u32 %s531, 4
          %s543 = int_to_ptr.vmem [resolvable:$true] %s542
          %548 = dma.vmem_to_hbm [thread:$0]  %s543, 256, %s541, %s528, 64, 64, 4
        $region48: #{tpu_custom_call.1} parent=39 // pred_fallthru
          _
      $region40: #{tpu_custom_call.1} parent=5 // pred_fallthru
        _
      %p549 = scmp.le.s32.totalorder 2, %s15
      // Predicated region
      $region49: #{tpu_custom_call.1} parent=5 // pred_check
        %p550 = pneg %p549
      $region50: #{tpu_custom_call.1} parent=5 // pred_check_branch
        %552 = sbr.rel (%p550) target = $region52
      $region51: #{tpu_custom_call.1} parent=5 // pred_region
        %s553 = ssub.s32 %s15, 2
        // Predicated region
        $region53: #{tpu_custom_call.1} parent=51 // pred_check
          %p554 = pneg %p170
        $region54: #{tpu_custom_call.1} parent=51 // pred_check_branch
          %556 = sbr.rel (%p554) target = $region56
        $region55: #{tpu_custom_call.1} parent=51 // pred_region
          %s557 = sand.u32 %s155, 1
          %s558 = scalar_lea.sflag [#allocation4], %s557
          %s559 = sand.u32 %s155, 1
          %s560 = smul.addr %s559, 16
          %s561 = scalar_lea.vmem [#allocation5], %s560
          %562 = dma.done %s558, 256
        $region56: #{tpu_custom_call.1} parent=51 // pred_fallthru
          _
      $region52: #{tpu_custom_call.1} parent=5 // pred_fallthru
        _
    $region6: #{tpu_custom_call.1} parent=1 // loop_footer
      %s19 = sadd.s32 1, %s15
    $region7: #{tpu_custom_call.1} parent=1 // loop_footer_branch
      %14 = sbr.rel target = $region3
    $region8: #{tpu_custom_call.1} parent=1 // loop_exit
      _
    %563 = vsyncpa [#allocation3], 1
    %s564 = scalar_lea.sflag [#allocation3], 1
    %565 = vsyncpa %s564, 1
    %566 = vsyncpa [#allocation4], 1
    %s567 = scalar_lea.sflag [#allocation4], 1
    %568 = vsyncpa %s567, 1

</llo_original>
